<compile_context>
chip_gen: v5e
topology: v5e:2x2
jax: 0.10.0
libtpu: 0.0.40
codegen_flags: <defaults>
</compile_context>

<pallas_src>
import jax
import jax.numpy as jnp
from jax.experimental import pallas as pl
from jax.experimental.pallas import tpu as pltpu


def _round_up(x, m):
    return (x + m - 1) // m * m


def _slotcell_kernel(xh_ref, s_ref, w_ref, b_ref, out_ref):
    # One fused GEMM: (BM, K) @ (K, S_pad) on the MXU, f32 accumulation.
    logits = jnp.dot(xh_ref[...].astype(jnp.float32), w_ref[...],
                     preferred_element_type=jnp.float32) + b_ref[...]
    r_t = jax.nn.sigmoid(logits)                       # reading gate (EUP+VPU)
    out_ref[...] = (s_ref[...].astype(jnp.float32) * r_t).astype(out_ref.dtype)


def prepare_slot_cell_params(w_ir, b_ir, w_hr, b_hr, alpha=0.5):
    """One-time host-side parameter prep (hoist out of any scan/training loop).

    w_ir: (input_size, slot_size)   w_hr: (hidden_size, slot_size)
    Returns (w_fused, b_fused) with the slot dim padded to a multiple of 128:
      w_fused: (input_size+hidden_size, S_pad)
      b_fused: (1, S_pad)
    alpha is folded into the hidden-path weights/bias here.
    """
    slot_size = w_ir.shape[1]
    s_pad = _round_up(slot_size, 128)
    w = jnp.concatenate(
        [w_ir.astype(jnp.float32), alpha * w_hr.astype(jnp.float32)], axis=0)
    b = (b_ir.astype(jnp.float32) + alpha * b_hr.astype(jnp.float32)
         ).reshape(1, slot_size)
    if s_pad != slot_size:
        w = jnp.pad(w, ((0, 0), (0, s_pad - slot_size)))
        b = jnp.pad(b, ((0, 0), (0, s_pad - slot_size)))
    return w, b


def slot_cell_forward(inputs, hidden_states, s_prev, w_fused, b_fused,
                      slot_size):
    """Pallas-backed SlotCell forward.

    inputs:        (B, input_size)
    hidden_states: (B, hidden_size)
    s_prev:        (B, slot_size)
    w_fused:       (input_size+hidden_size, S_pad)   from prepare_slot_cell_params
    b_fused:       (1, S_pad)
    Returns s_after: (B, slot_size)
    """
    B = inputs.shape[0]
    K = inputs.shape[1] + hidden_states.shape[1]
    s_pad = w_fused.shape[1]

    # Concatenate activations once; pad batch for sublane alignment / tiling.
    xh = jnp.concatenate([inputs, hidden_states], axis=1)          # (B, K)
    bm = 512 if B > 512 else _round_up(B, 8)
    b_pad = _round_up(B, bm)
    if b_pad != B:
        xh = jnp.pad(xh, ((0, b_pad - B), (0, 0)))
    s_in = s_prev
    if b_pad != B or s_pad != slot_size:
        s_in = jnp.pad(s_prev, ((0, b_pad - B), (0, s_pad - slot_size)))

    grid = (b_pad // bm,)
    out = pl.pallas_call(
        _slotcell_kernel,
        out_shape=jax.ShapeDtypeStruct((b_pad, s_pad), s_prev.dtype),
        grid=grid,
        in_specs=[
            pl.BlockSpec((bm, K), lambda i: (i, 0)),       # [x | h] tile
            pl.BlockSpec((bm, s_pad), lambda i: (i, 0)),   # s_prev tile
            pl.BlockSpec((K, s_pad), lambda i: (0, 0)),    # fused weights (resident)
            pl.BlockSpec((1, s_pad), lambda i: (0, 0)),    # fused bias (resident)
        ],
        out_specs=pl.BlockSpec((bm, s_pad), lambda i: (i, 0)),
        compiler_params=pltpu.CompilerParams(
            dimension_semantics=("parallel",)),
    )(xh, s_in, w_fused, b_fused)

    # Slice padded lanes / rows back off so padding never reaches downstream state.
    return out[:B, :slot_size]


def _init_linear(key, in_features, out_features):
    """Deterministic init mimicking torch.nn.Linear (uniform +- 1/sqrt(fan_in)).
    Returns weight already transposed to (in_features, out_features)."""
    kw, kb = jax.random.split(key)
    bound = 1.0 / jnp.sqrt(jnp.float32(in_features))
    w = jax.random.uniform(kw, (in_features, out_features), jnp.float32,
                           minval=-bound, maxval=bound)
    b = jax.random.uniform(kb, (out_features,), jnp.float32,
                           minval=-bound, maxval=bound)
    return w, b


if __name__ == "__main__":
    batch = 8
    input_size = 16
    hidden_size = 32
    slot_size = 64
    alpha = 0.5

    key = jax.random.PRNGKey(0)
    k_x, k_h, k_s, k_ir, k_hr = jax.random.split(key, 5)

    inputs = jax.random.normal(k_x, (batch, input_size), jnp.float32)
    hidden_states = jax.random.normal(k_h, (batch, hidden_size), jnp.float32)
    s_prev = jax.random.normal(k_s, (batch, slot_size), jnp.float32)

    w_ir, b_ir = _init_linear(k_ir, input_size, slot_size)
    w_hr, b_hr = _init_linear(k_hr, hidden_size, slot_size)

    # One-time parameter prep (fold alpha, fuse weights, pad slot dim to 128).
    w_fused, b_fused = prepare_slot_cell_params(w_ir, b_ir, w_hr, b_hr, alpha)

    s_after = slot_cell_forward(inputs, hidden_states, s_prev,
                                w_fused, b_fused, slot_size)
    jax.block_until_ready(s_after)

    # Pure-JAX reference check against the original (unfused) formulation.
    r_ref = jax.nn.sigmoid(inputs @ w_ir + b_ir
                           + alpha * (hidden_states @ w_hr + b_hr))
    s_ref = s_prev * r_ref
    assert s_after.shape == s_ref.shape, "shape mismatch vs reference"
    assert jnp.allclose(s_after, s_ref, atol=1e-5, rtol=1e-5), \
        "mismatch vs reference"

    print("KERNEL_OK")
</pallas_src>

<mosaic_0001>
module attributes {stable_mosaic.version = 11 : i64} {
  func.func @_slotcell_kernel(%arg0: i32, %arg1: memref<8x48xf32, #tpu.memory_space<vmem>>, %arg2: memref<8x128xf32, #tpu.memory_space<vmem>>, %arg3: memref<48x128xf32, #tpu.memory_space<vmem>>, %arg4: memref<1x128xf32, #tpu.memory_space<vmem>>, %arg5: memref<8x128xf32, #tpu.memory_space<vmem>>) attributes {dimension_semantics = [#tpu.dimension_semantics<parallel>], iteration_bounds = array<i64: 1>, scalar_prefetch = 0 : i64, scratch_operands = 0 : i64, tpu.core_type = #tpu.core_type<tc>, window_params = [{transform_indices = @transform_0, window_bounds = array<i64: 8, 48>}, {transform_indices = @transform_1, window_bounds = array<i64: 8, 128>}, {pipeline_mode = #tpu.pipeline_mode<synchronous>, transform_indices = @transform_2, window_bounds = array<i64: 48, 128>}, {pipeline_mode = #tpu.pipeline_mode<synchronous>, transform_indices = @transform_3, window_bounds = array<i64: 1, 128>}, {transform_indices = @transform_4, window_bounds = array<i64: 8, 128>}]} {
    %c0 = arith.constant 0 : index
    %c0_0 = arith.constant 0 : index
    %0 = vector.load %arg1[%c0, %c0_0] : memref<8x48xf32, #tpu.memory_space<vmem>>, vector<8x48xf32>
    %c0_1 = arith.constant 0 : index
    %c0_2 = arith.constant 0 : index
    %1 = vector.load %arg3[%c0_1, %c0_2] : memref<48x128xf32, #tpu.memory_space<vmem>>, vector<48x128xf32>
    %cst = arith.constant dense<0.000000e+00> : vector<8x128xf32>
    %2 = tpu.matmul %0, %1, %cst {dimension_numbers = #tpu.dot_dimension_numbers<[1], [0], [0], [1], [0, 0, 1, 1], [], []>} : vector<8x48xf32>, vector<48x128xf32>, vector<8x128xf32> -> vector<8x128xf32>
    %c0_3 = arith.constant 0 : index
    %c0_4 = arith.constant 0 : index
    %3 = vector.load %arg4[%c0_3, %c0_4] : memref<1x128xf32, #tpu.memory_space<vmem>>, vector<1x128xf32>
    %4 = vector.broadcast %3 : vector<1x128xf32> to vector<8x128xf32>
    %5 = arith.addf %2, %4 : vector<8x128xf32>
    %6 = arith.negf %5 : vector<8x128xf32>
    %7 = math.exp %6 : vector<8x128xf32>
    %cst_5 = arith.constant 1.000000e+00 : f32
    %8 = vector.broadcast %cst_5 : f32 to vector<8x128xf32>
    %9 = arith.addf %8, %7 : vector<8x128xf32>
    %10 = arith.divf %8, %9 : vector<8x128xf32>
    %c0_6 = arith.constant 0 : index
    %c0_7 = arith.constant 0 : index
    %11 = vector.load %arg2[%c0_6, %c0_7] : memref<8x128xf32, #tpu.memory_space<vmem>>, vector<8x128xf32>
    %12 = arith.mulf %11, %10 : vector<8x128xf32>
    %c0_8 = arith.constant 0 : index
    %c0_9 = arith.constant 0 : index
    %13 = vector.load %arg5[%c0_8, %c0_9] : memref<8x128xf32, #tpu.memory_space<vmem>>, vector<8x128xf32>
    tpu.vector_store %arg5[%c0_8, %c0_9], %12 {strides = array<i32>} : memref<8x128xf32, #tpu.memory_space<vmem>>, vector<8x128xf32>,
    return
  }
  func.func @transform_0(%arg0: i32) -> (i32, i32) {
    %c0_i32 = arith.constant 0 : i32
    %c0_i32_0 = arith.constant 0 : i32
    return %arg0, %c0_i32 : i32, i32
  }
  func.func @transform_1(%arg0: i32) -> (i32, i32) {
    %c0_i32 = arith.constant 0 : i32
    %c0_i32_0 = arith.constant 0 : i32
    return %arg0, %c0_i32 : i32, i32
  }
  func.func @transform_2(%arg0: i32) -> (i32, i32) {
    %c0_i32 = arith.constant 0 : i32
    %c0_i32_0 = arith.constant 0 : i32
    %c0_i32_1 = arith.constant 0 : i32
    return %c0_i32, %c0_i32_0 : i32, i32
  }
  func.func @transform_3(%arg0: i32) -> (i32, i32) {
    %c0_i32 = arith.constant 0 : i32
    %c0_i32_0 = arith.constant 0 : i32
    %c0_i32_1 = arith.constant 0 : i32
    return %c0_i32, %c0_i32_0 : i32, i32
  }
  func.func @transform_4(%arg0: i32) -> (i32, i32) {
    %c0_i32 = arith.constant 0 : i32
    %c0_i32_0 = arith.constant 0 : i32
    return %arg0, %c0_i32 : i32, i32
  }
}

</mosaic_0001>

<llo_original>
// kernel: tpu_custom_call.1
$region0: #{tpu_custom_call.1}
  #allocation0 [shape = 'u32[]', space=smem, size = 0x4, offset = 0x4, fixed_abs, tag = 'smem constant byte address 0x4 - core index']
  #allocation1 [shape = 'u32[72,128]{1,0:T(1,128)}', space=vmem, size = 0x9000, scoped, tag = 'internal scratch']
  %s0 = inlined_call_operand.hbm [shape: f32[8,48], index: 0, kind: input, shape index: {}]
  %s1 = inlined_call_operand.hbm [shape: f32[8,128], index: 1, kind: input, shape index: {}]
  %s2 = inlined_call_operand.hbm [shape: f32[48,128], index: 2, kind: input, shape index: {}]
  %s3 = inlined_call_operand.vmem [shape: f32[1,128], index: 3, kind: input, shape index: {}]
  %s4 = inlined_call_operand.hbm [shape: f32[8,128], index: 4, kind: output, shape index: {}]
  %s5 = sld [smem:[#allocation0]]
  $region38: #{tpu_custom_call.1} parent=0
    _
  %s7 = ssub.s32 1, %s5
  %s8 = scalar_select 0, %s7, %s5
  $region1: #{tpu_custom_call.1} parent=0
    #allocation2 [shape = 'u8[4096]{0}', space=vmem, size = 0x1000, scoped, tag = 'input window, operand 0, single buffered']
    #allocation3 [shape = 's32[1]{0}', space=sflag, size = 0x4, scoped, tag = 'scoped memory for tpu_custom_call.1']
    #allocation4 [shape = 's32[1]{0}', space=sflag, size = 0x4, scoped, tag = 'scoped memory for tpu_custom_call.1']
    #allocation5 [shape = 'u8[4096]{0}', space=vmem, size = 0x1000, scoped, tag = 'input window, operand 1, single buffered']
    #allocation6 [shape = 's32[1]{0}', space=sflag, size = 0x4, scoped, tag = 'scoped memory for tpu_custom_call.1']
    #allocation7 [shape = 'u8[24576]{0}', space=vmem, size = 0x6000, scoped, tag = 'input window, operand 2, single buffered']
    #allocation8 [shape = 'u8[4096]{0}', space=vmem, size = 0x1000, scoped, tag = 'output window, operand 0, single buffered']
    %9 = vsyncpa [#allocation3], 0
    %10 = vsyncpa [#allocation6], 0
    %11 = vsyncpa [#allocation4], 0
    // Predicated region
    $region2: #{tpu_custom_call.1} parent=1 // pred_check
      _
    $region3: #{tpu_custom_call.1} parent=1 // pred_check_branch
      %13 = sbr.rel (0) target = $region5
    $region4: #{tpu_custom_call.1} parent=1 // pred_region
      %15 = vsyncadd [#allocation3], 0
      %s17 = sshll.u32 %s0, 4
      %s18 = int_to_ptr.hbm [resolvable:$true] %s17
      %s19 = sshll.u32 [#allocation2], 4
      %s20 = int_to_ptr.vmem [resolvable:$true] %s19
      %22 = dma.hbm_to_vmem [thread:$0]  %s18, 128, %s20, [#allocation3]
    $region5: #{tpu_custom_call.1} parent=1 // pred_fallthru
      _
    // Predicated region
    $region6: #{tpu_custom_call.1} parent=1 // pred_check
      _
    $region7: #{tpu_custom_call.1} parent=1 // pred_check_branch
      %24 = sbr.rel (0) target = $region9
    $region8: #{tpu_custom_call.1} parent=1 // pred_region
      %26 = vsyncadd [#allocation6], 0
      %s28 = sshll.u32 %s1, 4
      %s29 = int_to_ptr.hbm [resolvable:$true] %s28
      %s30 = sshll.u32 [#allocation5], 4
      %s31 = int_to_ptr.vmem [resolvable:$true] %s30
      %33 = dma.hbm_to_vmem [thread:$0]  %s29, 128, %s31, [#allocation6]
    $region9: #{tpu_custom_call.1} parent=1 // pred_fallthru
      _
    // Predicated region
    $region10: #{tpu_custom_call.1} parent=1 // pred_check
      _
    $region11: #{tpu_custom_call.1} parent=1 // pred_check_branch
      %35 = sbr.rel (0) target = $region13
    $region12: #{tpu_custom_call.1} parent=1 // pred_region
      %37 = vsyncadd [#allocation6], 0
      %s38 = sshll.u32 %s2, 4
      %s39 = int_to_ptr.hbm [resolvable:$true] %s38
      %s40 = sshll.u32 [#allocation7], 4
      %s41 = int_to_ptr.vmem [resolvable:$true] %s40
      %46 = dma.hbm_to_vmem [thread:$0]  %s39, 768, %s41, [#allocation6], 128, 128, 8
    $region13: #{tpu_custom_call.1} parent=1 // pred_fallthru
      _
    // Predicated region
    $region14: #{tpu_custom_call.1} parent=1 // pred_check
      _
    $region15: #{tpu_custom_call.1} parent=1 // pred_check_branch
      %48 = sbr.rel (0) target = $region17
    $region16: #{tpu_custom_call.1} parent=1 // pred_region
      _
    $region17: #{tpu_custom_call.1} parent=1 // pred_fallthru
      _
    // Predicated region
    $region18: #{tpu_custom_call.1} parent=1 // pred_check
      _
    $region19: #{tpu_custom_call.1} parent=1 // pred_check_branch
      %50 = sbr.rel (0) target = $region21
    $region20: #{tpu_custom_call.1} parent=1 // pred_region
      %52 = dma.done [#allocation3], 128
    $region21: #{tpu_custom_call.1} parent=1 // pred_fallthru
      _
    // Predicated region
    $region22: #{tpu_custom_call.1} parent=1 // pred_check
      _
    $region23: #{tpu_custom_call.1} parent=1 // pred_check_branch
      %54 = sbr.rel (0) target = $region25
    $region24: #{tpu_custom_call.1} parent=1 // pred_region
      %56 = dma.done [#allocation6], 128
    $region25: #{tpu_custom_call.1} parent=1 // pred_fallthru
      _
    // Predicated region
    $region26: #{tpu_custom_call.1} parent=1 // pred_check
      _
    $region27: #{tpu_custom_call.1} parent=1 // pred_check_branch
      %58 = sbr.rel (0) target = $region29
    $region28: #{tpu_custom_call.1} parent=1 // pred_region
      %60 = dma.done [#allocation6], 768
    $region29: #{tpu_custom_call.1} parent=1 // pred_fallthru
      _
    %v61 = vld [vmem:[#allocation2] sm:$0xff]
    %v62 = vld [vmem:[#allocation7] sm:$0xff]
    %v63 = vld [vmem:[#allocation7 + $0x8] sm:$0xff]
    %v64 = vld [vmem:[#allocation7 + $0x10] sm:$0xff]
    %v65 = vld [vmem:[#allocation7 + $0x18] sm:$0xff]
    %v66 = vld [vmem:[#allocation7 + $0x20] sm:$0xff]
    %v67 = vld [vmem:[#allocation7 + $0x28] sm:$0xff]
    %v68 = vld [vmem:[%s3] sm:$0x1]
    %v70 = vperm.slane %v68, 0
    %vm72 = vcmask 392192
    %v74 = vsel %vm72, %v61, 0
    %76 = vmatpush.msra.mxu0 0.0
    %77 = vmatpush.msra.mxu0 0.0
    %78 = vmatpush.msra.mxu0 0.0
    %79 = vmatpush.msra.mxu0 0.0
    %80 = vmatpush.msra.mxu0 0.0
    %81 = vmatpush.msra.mxu0 0.0
    %82 = vmatpush.msra.mxu0 0.0
    %83 = vmatpush.msra.mxu0 0.0
    %84 = vmatpush.msra.mxu0 0.0
    %85 = vmatpush.msra.mxu0 0.0
    %86 = vmatpush.msra.mxu0 %v67
    %87 = vmatpush.msra.mxu0 %v66
    %88 = vmatpush.msra.mxu0 %v65
    %89 = vmatpush.msra.mxu0 %v64
    %90 = vmatpush.msra.mxu0 %v63
    %91 = vmatpush.msra.mxu0 %v62
    %92 = vmatmul.f32.gmra.mxu0 %v74
    %v93 = vpop.f32.mrf.mxu0
    %v94 = vadd.f32 %v70, %v93
    %95 = vdwg.mxu0
    %v96 = vxor.u32 %v94, 2147483648
    %v97 = vmul.f32 %v96, 1.442695
    %v98 = vpow.pop %v97
    %v99 = vadd.f32 %v98, 1.0
    %v100 = vrcp.pop %v99
    %v101 = vmul.f32 %v99, %v100
    %v102 = vsub.f32 1.0, %v101
    %v103 = vmul.f32 %v100, %v102
    %v104 = vadd.f32 %v100, %v103
    %vm105 = vweird.f32 %v99
    %vm106 = vweird.f32 %v100
    %vm107 = vmor %vm105, %vm106
    %v108 = vsel %vm107, %v100, %v104
    %v109 = vand.u32 2147483647, %v99
    %vm110 = vcmp.eq.f32.partialorder %v109, 8.507059e+37
    %v111 = vand.u32 %v99, 2147483648
    %v112 = vor.u32 1.1754944e-38, %v111
    %v113 = vsel %vm110, %v112, %v108
    %v114 = vmul.f32 1.0, %v113
    %v115 = vld [vmem:[#allocation5] sm:$0xff]
    %v116 = vmul.f32 %v115, %v114
    %117 = vst [vmem:[#allocation8] sm:$0xff] %v116
    // Predicated region
    $region30: #{tpu_custom_call.1} parent=1 // pred_check
      _
    $region31: #{tpu_custom_call.1} parent=1 // pred_check_branch
      %119 = sbr.rel (0) target = $region33
    $region32: #{tpu_custom_call.1} parent=1 // pred_region
      %121 = vsyncadd [#allocation4], 0
      %s123 = sshll.u32 [#allocation8], 4
      %s124 = int_to_ptr.vmem [resolvable:$true] %s123
      %s125 = sshll.u32 %s4, 4
      %s126 = int_to_ptr.hbm [resolvable:$true] %s125
      %128 = dma.vmem_to_hbm [thread:$0]  %s124, 128, %s126, [#allocation4]
    $region33: #{tpu_custom_call.1} parent=1 // pred_fallthru
      _
    // Predicated region
    $region34: #{tpu_custom_call.1} parent=1 // pred_check
      _
    $region35: #{tpu_custom_call.1} parent=1 // pred_check_branch
      %130 = sbr.rel (0) target = $region37
    $region36: #{tpu_custom_call.1} parent=1 // pred_region
      %132 = dma.done [#allocation4], 128
    $region37: #{tpu_custom_call.1} parent=1 // pred_fallthru
      _
    %133 = vsyncpa [#allocation3], 1
    %134 = vsyncpa [#allocation6], 1
    %135 = vsyncpa [#allocation4], 1

</llo_original>
